<compile_context>
chip_gen: v7x
topology: tpu7x:2x2x1
jax: 0.10.0
libtpu: 0.0.40
codegen_flags: <defaults>
</compile_context>

<pallas_src>
import functools
import math

import jax
import jax.numpy as jnp
from jax.experimental import pallas as pl
from jax.experimental.pallas import tpu as pltpu


def _round_up(x, m):
    return ((x + m - 1) // m) * m


def _deepset_kernel(x_ref, w1_ref, b1_ref, w2_ref, b2_ref, w3t_ref,
                    gamma_ref, beta_ref, b3_ref, out_ref, *,
                    n_agents, hidden_dim, use_layer_norm):
    h = hidden_dim

    # x: (tile_bt, A*F) bf16, agents packed densely along the lane axis.
    x = x_ref[...]

    # fc1 for all agents at once via the block-diagonal W1 -> (tile_bt, A*H).
    h1 = jnp.dot(x, w1_ref[...], preferred_element_type=jnp.float32)
    h1 = jnp.maximum(h1 + b1_ref[...], 0.0)

    # Permutation-invariant pooling: sum the A lane chunks of width H.
    s = h1[:, 0:h]
    for a_idx in range(1, n_agents):
        s = s + h1[:, a_idx * h:(a_idx + 1) * h]            # (tile_bt, H) f32

    # fc2 + relu (bf16 MXU, f32 accumulate / VPU epilogue).
    h2 = jnp.dot(s.astype(w2_ref.dtype), w2_ref[...],
                 preferred_element_type=jnp.float32)
    h2 = jnp.maximum(h2 + b2_ref[...], 0.0)

    if use_layer_norm:
        mean = jnp.mean(h2, axis=-1, keepdims=True)
        var = jnp.mean(jnp.square(h2 - mean), axis=-1, keepdims=True)
        h2 = (h2 - mean) * jax.lax.rsqrt(var + 1e-5)
        h2 = h2 * gamma_ref[...] + beta_ref[...]

    # fc3 (single output unit): VPU multiply + lane reduce; the
    # /n_agents/sqrt(H) scale is already folded into w3t/b3 by the wrapper.
    q = jnp.sum(h2 * w3t_ref[...], axis=-1, keepdims=True) + b3_ref[0]

    # Lane-dense output row (unmasked stores).
    out_ref[...] = jnp.reshape(q, (1, -1)).astype(out_ref.dtype)


def deepset_forward(inputs, params, *, n_agents, hidden_dim,
                    use_layer_norm=False, ln_params=None, tile_bt=2048):
    """inputs: (bs, max_t, n_agents, input_shape) -> (bs, max_t, n_agents, 1)"""
    bs, max_t, a, f = inputs.shape
    assert a == n_agents
    bt = bs * max_t
    h = hidden_dim
    w1, b1, w2, b2, w3, b3 = params

    # Lane-pack agents x features; dominant x traffic goes to HBM as bf16.
    x2d = inputs.reshape(bt, a * f).astype(jnp.bfloat16)

    # Block-diagonal W1: fc1 for every agent becomes one (A*F, A*H) matmul.
    w1_bd = jnp.kron(jnp.eye(a, dtype=jnp.float32),
                     w1.astype(jnp.float32)).astype(jnp.bfloat16)
    b1_t = jnp.tile(b1.reshape(1, h), (1, a)).astype(jnp.float32)   # (1, A*H)
    w2_b = w2.astype(jnp.bfloat16)
    b2_f = b2.reshape(1, h).astype(jnp.float32)

    # Fold the output scale into fc3's weights/bias (saves per-tile VPU work).
    scale = 1.0 / (n_agents * math.sqrt(hidden_dim))
    w3t = (w3.reshape(1, h) * scale).astype(jnp.float32)
    b3s = (b3.reshape(1) * scale).astype(jnp.float32)               # SMEM

    if use_layer_norm and ln_params is not None:
        gamma, beta = ln_params
    else:
        gamma = jnp.ones((h,), jnp.float32)
        beta = jnp.zeros((h,), jnp.float32)
    gamma = gamma.reshape(1, h).astype(jnp.float32)
    beta = beta.reshape(1, h).astype(jnp.float32)

    # Tile sizing: lane-aligned (output row), capped so that whenever BT is
    # big enough there are >=2 "parallel" grid steps (v7x has 2 TensorCores).
    # The non-divisible BT remainder is handled by Pallas' masked boundary
    # block -- no wrapper-side pad copy of x.
    half_bt = _round_up(max(1, (bt + 1) // 2), 128)
    tile_bt = min(_round_up(tile_bt, 128), half_bt)
    num_steps = pl.cdiv(bt, tile_bt)
    out_cols = num_steps * tile_bt          # padded output allocation (tiny)

    flops = 2 * bt * (a * f) * (a * h) + 2 * bt * h * h + 2 * bt * h
    bytes_accessed = (x2d.size * 2 + out_cols * 4
                      + (w1_bd.size + w2.size) * 2 + (a * h + 4 * h + 1) * 4)
    cost = pl.CostEstimate(flops=flops,
                           transcendentals=bt if use_layer_norm else 0,
                           bytes_accessed=bytes_accessed)

    kernel = functools.partial(_deepset_kernel, n_agents=n_agents,
                               hidden_dim=h, use_layer_norm=use_layer_norm)

    q = pl.pallas_call(
        kernel,
        out_shape=jax.ShapeDtypeStruct((1, out_cols), jnp.float32),
        grid=(num_steps,),
        in_specs=[
            pl.BlockSpec((tile_bt, a * f), lambda i: (i, 0)),   # x (bf16)
            pl.BlockSpec((a * f, a * h), lambda i: (0, 0)),     # block-diag W1
            pl.BlockSpec((1, a * h), lambda i: (0, 0)),         # b1 tiled
            pl.BlockSpec((h, h), lambda i: (0, 0)),             # w2 (bf16)
            pl.BlockSpec((1, h), lambda i: (0, 0)),             # b2
            pl.BlockSpec((1, h), lambda i: (0, 0)),             # w3^T * scale
            pl.BlockSpec((1, h), lambda i: (0, 0)),             # LN gamma
            pl.BlockSpec((1, h), lambda i: (0, 0)),             # LN beta
            pl.BlockSpec(memory_space=pltpu.MemorySpace.SMEM),  # b3 * scale
        ],
        out_specs=pl.BlockSpec((1, tile_bt), lambda i: (0, i)),
        compiler_params=pltpu.CompilerParams(
            dimension_semantics=("parallel",)),
        cost_estimate=cost,
    )(x2d, w1_bd, b1_t, w2_b, b2_f, w3t, gamma, beta, b3s)

    q = q[0, :bt].reshape(bs, max_t, 1, 1)
    # repeat_interleave over the agent axis == broadcast (no HBM materialize).
    return jnp.broadcast_to(q, (bs, max_t, n_agents, 1))


def _reference_forward(inputs, params, *, n_agents, hidden_dim,
                       use_layer_norm=False, ln_params=None):
    bs, max_t, a, f = inputs.shape
    w1, b1, w2, b2, w3, b3 = params
    x = inputs.reshape(bs * max_t, a, f).astype(jnp.float32)
    h1 = jax.nn.relu(jnp.einsum("taf,fh->tah", x, w1) + b1)
    s = jnp.sum(h1, axis=1)
    h2 = jax.nn.relu(s @ w2 + b2)
    if use_layer_norm:
        gamma, beta = (ln_params if ln_params is not None
                       else (jnp.ones((hidden_dim,)), jnp.zeros((hidden_dim,))))
        mean = jnp.mean(h2, axis=-1, keepdims=True)
        var = jnp.mean((h2 - mean) ** 2, axis=-1, keepdims=True)
        h2 = (h2 - mean) * jax.lax.rsqrt(var + 1e-5)
        h2 = h2 * gamma.reshape(1, -1) + beta.reshape(1, -1)
    q = h2 @ w3 + b3
    q = q / n_agents / math.sqrt(hidden_dim)
    return jnp.repeat(q.reshape(bs, max_t, 1, 1), n_agents, axis=2)


def init_params(key, input_shape, hidden_dim):
    """Deterministic init mimicking nn.Linear (uniform +-1/sqrt(fan_in))."""
    # TODO(synk): optional orthogonal_init_ path of the module not reproduced.
    ks = jax.random.split(key, 6)

    def lin(kw, kb, fan_in, fan_out):
        bound = 1.0 / math.sqrt(fan_in)
        w = jax.random.uniform(kw, (fan_in, fan_out), jnp.float32, -bound, bound)
        b = jax.random.uniform(kb, (1, fan_out), jnp.float32, -bound, bound)
        return w, b

    w1, b1 = lin(ks[0], ks[1], input_shape, hidden_dim)
    w2, b2 = lin(ks[2], ks[3], hidden_dim, hidden_dim)
    w3, b3 = lin(ks[4], ks[5], hidden_dim, 1)
    return (w1, b1, w2, b2, w3, b3)


if __name__ == "__main__":
    # Small deterministic shapes consistent with the critic.
    bs, max_t = 2, 8
    n_agents = 4
    input_shape = 24      # per-agent critic input features (from scheme)
    hidden_dim = 32

    key = jax.random.PRNGKey(0)
    k_in, k_p, k_ln1, k_ln2, k_in2 = jax.random.split(key, 5)
    inputs = jax.random.normal(
        k_in, (bs, max_t, n_agents, input_shape), jnp.float32)
    params = init_params(k_p, input_shape, hidden_dim)

    # bf16 matmul inputs -> compare against the f32 reference with loosened
    # tolerances (~1e-2 relative).
    ATOL, RTOL = 1e-2, 5e-2

    # 1) default path (no layer norm).
    out = jax.block_until_ready(
        deepset_forward(inputs, params, n_agents=n_agents,
                        hidden_dim=hidden_dim))
    ref = _reference_forward(inputs, params, n_agents=n_agents,
                             hidden_dim=hidden_dim)
    assert out.shape == (bs, max_t, n_agents, 1)
    assert jnp.allclose(out, ref, atol=ATOL, rtol=RTOL)

    # 2) multi-step grid with a non-divisible BT remainder (exercises the
    #    masked boundary block; no wrapper-side pad copy of x).
    bs2, max_t2 = 4, 37   # bt = 148 -> 2 grid steps of 128, partial tail
    inputs2 = jax.random.normal(
        k_in2, (bs2, max_t2, n_agents, input_shape), jnp.float32)
    out2 = jax.block_until_ready(
        deepset_forward(inputs2, params, n_agents=n_agents,
                        hidden_dim=hidden_dim))
    ref2 = _reference_forward(inputs2, params, n_agents=n_agents,
                              hidden_dim=hidden_dim)
    assert out2.shape == (bs2, max_t2, n_agents, 1)
    assert jnp.allclose(out2, ref2, atol=ATOL, rtol=RTOL)

    # 3) layer-norm path with learned affine (gamma/beta) parameters.
    gamma = 1.0 + 0.1 * jax.random.normal(k_ln1, (hidden_dim,), jnp.float32)
    beta = 0.1 * jax.random.normal(k_ln2, (hidden_dim,), jnp.float32)
    out3 = jax.block_until_ready(
        deepset_forward(inputs, params, n_agents=n_agents,
                        hidden_dim=hidden_dim, use_layer_norm=True,
                        ln_params=(gamma, beta)))
    ref3 = _reference_forward(inputs, params, n_agents=n_agents,
                              hidden_dim=hidden_dim, use_layer_norm=True,
                              ln_params=(gamma, beta))
    assert jnp.allclose(out3, ref3, atol=ATOL, rtol=RTOL)

    print("KERNEL_OK")
</pallas_src>

<mosaic_0001>
module attributes {stable_mosaic.version = 11 : i64} {
  func.func @_deepset_kernel(%arg0: i32, %arg1: memref<128x96xbf16, #tpu.memory_space<vmem>>, %arg2: memref<96x128xbf16, #tpu.memory_space<vmem>>, %arg3: memref<1x128xf32, #tpu.memory_space<vmem>>, %arg4: memref<32x32xbf16, #tpu.memory_space<vmem>>, %arg5: memref<1x32xf32, #tpu.memory_space<vmem>>, %arg6: memref<1x32xf32, #tpu.memory_space<vmem>>, %arg7: memref<1x32xf32, #tpu.memory_space<vmem>>, %arg8: memref<1x32xf32, #tpu.memory_space<vmem>>, %arg9: memref<1xf32, #tpu.memory_space<smem>>, %arg10: memref<1x128xf32, #tpu.memory_space<vmem>>) attributes {dimension_semantics = [#tpu.dimension_semantics<parallel>], iteration_bounds = array<i64: 1>, scalar_prefetch = 0 : i64, scratch_operands = 0 : i64, tpu.core_type = #tpu.core_type<tc>, window_params = [{transform_indices = @transform_0, window_bounds = array<i64: 128, 96>}, {pipeline_mode = #tpu.pipeline_mode<synchronous>, transform_indices = @transform_1, window_bounds = array<i64: 96, 128>}, {pipeline_mode = #tpu.pipeline_mode<synchronous>, transform_indices = @transform_2, window_bounds = array<i64: 1, 128>}, {pipeline_mode = #tpu.pipeline_mode<synchronous>, transform_indices = @transform_3, window_bounds = array<i64: 32, 32>}, {pipeline_mode = #tpu.pipeline_mode<synchronous>, transform_indices = @transform_4, window_bounds = array<i64: 1, 32>}, {pipeline_mode = #tpu.pipeline_mode<synchronous>, transform_indices = @transform_5, window_bounds = array<i64: 1, 32>}, {pipeline_mode = #tpu.pipeline_mode<synchronous>, transform_indices = @transform_6, window_bounds = array<i64: 1, 32>}, {pipeline_mode = #tpu.pipeline_mode<synchronous>, transform_indices = @transform_7, window_bounds = array<i64: 1, 32>}, {transform_indices = @transform_8, window_bounds = array<i64: 1>}, {transform_indices = @transform_9, window_bounds = array<i64: 1, 128>}]} {
    %c0 = arith.constant 0 : index
    %c0_0 = arith.constant 0 : index
    %0 = vector.load %arg1[%c0, %c0_0] : memref<128x96xbf16, #tpu.memory_space<vmem>>, vector<128x96xbf16>
    %c0_1 = arith.constant 0 : index
    %c0_2 = arith.constant 0 : index
    %1 = vector.load %arg2[%c0_1, %c0_2] : memref<96x128xbf16, #tpu.memory_space<vmem>>, vector<96x128xbf16>
    %cst = arith.constant dense<0.000000e+00> : vector<128x128xf32>
    %2 = tpu.matmul %0, %1, %cst {dimension_numbers = #tpu.dot_dimension_numbers<[1], [0], [0], [1], [0, 0, 1, 1], [], []>} : vector<128x96xbf16>, vector<96x128xbf16>, vector<128x128xf32> -> vector<128x128xf32>
    %c0_3 = arith.constant 0 : index
    %c0_4 = arith.constant 0 : index
    %3 = vector.load %arg3[%c0_3, %c0_4] : memref<1x128xf32, #tpu.memory_space<vmem>>, vector<1x128xf32>
    %4 = vector.broadcast %3 : vector<1x128xf32> to vector<128x128xf32>
    %5 = arith.addf %2, %4 : vector<128x128xf32>
    %cst_5 = arith.constant 0.000000e+00 : f32
    %6 = vector.broadcast %cst_5 : f32 to vector<128x128xf32>
    %7 = arith.maximumf %5, %6 : vector<128x128xf32>
    %8 = vector.extract_strided_slice %7 {offsets = [0, 0], sizes = [128, 32], strides = [1, 1]} : vector<128x128xf32> to vector<128x32xf32>
    %9 = vector.extract_strided_slice %7 {offsets = [0, 32], sizes = [128, 32], strides = [1, 1]} : vector<128x128xf32> to vector<128x32xf32>
    %10 = arith.addf %8, %9 : vector<128x32xf32>
    %11 = vector.extract_strided_slice %7 {offsets = [0, 64], sizes = [128, 32], strides = [1, 1]} : vector<128x128xf32> to vector<128x32xf32>
    %12 = arith.addf %10, %11 : vector<128x32xf32>
    %13 = vector.extract_strided_slice %7 {offsets = [0, 96], sizes = [128, 32], strides = [1, 1]} : vector<128x128xf32> to vector<128x32xf32>
    %14 = arith.addf %12, %13 : vector<128x32xf32>
    %15 = arith.truncf %14 : vector<128x32xf32> to vector<128x32xbf16>
    %c0_6 = arith.constant 0 : index
    %c0_7 = arith.constant 0 : index
    %16 = vector.load %arg4[%c0_6, %c0_7] : memref<32x32xbf16, #tpu.memory_space<vmem>>, vector<32x32xbf16>
    %cst_8 = arith.constant dense<0.000000e+00> : vector<128x32xf32>
    %17 = tpu.matmul %15, %16, %cst_8 {dimension_numbers = #tpu.dot_dimension_numbers<[1], [0], [0], [1], [0, 0, 1, 1], [], []>} : vector<128x32xbf16>, vector<32x32xbf16>, vector<128x32xf32> -> vector<128x32xf32>
    %c0_9 = arith.constant 0 : index
    %c0_10 = arith.constant 0 : index
    %18 = vector.load %arg5[%c0_9, %c0_10] : memref<1x32xf32, #tpu.memory_space<vmem>>, vector<1x32xf32>
    %19 = vector.broadcast %18 : vector<1x32xf32> to vector<128x32xf32>
    %20 = arith.addf %17, %19 : vector<128x32xf32>
    %cst_11 = arith.constant 0.000000e+00 : f32
    %21 = vector.broadcast %cst_11 : f32 to vector<128x32xf32>
    %22 = arith.maximumf %20, %21 : vector<128x32xf32>
    %c0_12 = arith.constant 0 : index
    %c0_13 = arith.constant 0 : index
    %23 = vector.load %arg6[%c0_12, %c0_13] : memref<1x32xf32, #tpu.memory_space<vmem>>, vector<1x32xf32>
    %24 = vector.broadcast %23 : vector<1x32xf32> to vector<128x32xf32>
    %25 = arith.mulf %22, %24 : vector<128x32xf32>
    %cst_14 = arith.constant dense<0.000000e+00> : vector<128xf32>
    %26 = vector.multi_reduction <add>, %25, %cst_14 [1] : vector<128x32xf32> to vector<128xf32>
    %27 = vector.shape_cast %26 : vector<128xf32> to vector<128x1xf32>
    %c0_15 = arith.constant 0 : index
    %28 = memref.load %arg9[%c0_15] : memref<1xf32, #tpu.memory_space<smem>>
    %29 = vector.broadcast %28 : f32 to vector<128x1xf32>
    %30 = arith.addf %27, %29 : vector<128x1xf32>
    %31 = vector.shape_cast %30 : vector<128x1xf32> to vector<1x128xf32>
    %c0_16 = arith.constant 0 : index
    %c0_17 = arith.constant 0 : index
    %32 = vector.load %arg10[%c0_16, %c0_17] : memref<1x128xf32, #tpu.memory_space<vmem>>, vector<1x128xf32>
    tpu.vector_store %arg10[%c0_16, %c0_17], %31 {strides = array<i32>} : memref<1x128xf32, #tpu.memory_space<vmem>>, vector<1x128xf32>,
    return
  }
  func.func @transform_0(%arg0: i32) -> (i32, i32) {
    %c0_i32 = arith.constant 0 : i32
    %c0_i32_0 = arith.constant 0 : i32
    return %arg0, %c0_i32 : i32, i32
  }
  func.func @transform_1(%arg0: i32) -> (i32, i32) {
    %c0_i32 = arith.constant 0 : i32
    %c0_i32_0 = arith.constant 0 : i32
    %c0_i32_1 = arith.constant 0 : i32
    return %c0_i32, %c0_i32_0 : i32, i32
  }
  func.func @transform_2(%arg0: i32) -> (i32, i32) {
    %c0_i32 = arith.constant 0 : i32
    %c0_i32_0 = arith.constant 0 : i32
    %c0_i32_1 = arith.constant 0 : i32
    return %c0_i32, %c0_i32_0 : i32, i32
  }
  func.func @transform_3(%arg0: i32) -> (i32, i32) {
    %c0_i32 = arith.constant 0 : i32
    %c0_i32_0 = arith.constant 0 : i32
    %c0_i32_1 = arith.constant 0 : i32
    return %c0_i32, %c0_i32_0 : i32, i32
  }
  func.func @transform_4(%arg0: i32) -> (i32, i32) {
    %c0_i32 = arith.constant 0 : i32
    %c0_i32_0 = arith.constant 0 : i32
    %c0_i32_1 = arith.constant 0 : i32
    return %c0_i32, %c0_i32_0 : i32, i32
  }
  func.func @transform_5(%arg0: i32) -> (i32, i32) {
    %c0_i32 = arith.constant 0 : i32
    %c0_i32_0 = arith.constant 0 : i32
    %c0_i32_1 = arith.constant 0 : i32
    return %c0_i32, %c0_i32_0 : i32, i32
  }
  func.func @transform_6(%arg0: i32) -> (i32, i32) {
    %c0_i32 = arith.constant 0 : i32
    %c0_i32_0 = arith.constant 0 : i32
    %c0_i32_1 = arith.constant 0 : i32
    return %c0_i32, %c0_i32_0 : i32, i32
  }
  func.func @transform_7(%arg0: i32) -> (i32, i32) {
    %c0_i32 = arith.constant 0 : i32
    %c0_i32_0 = arith.constant 0 : i32
    %c0_i32_1 = arith.constant 0 : i32
    return %c0_i32, %c0_i32_0 : i32, i32
  }
  func.func @transform_8(%arg0: i32) -> i32 {
    %c0_i32 = arith.constant 0 : i32
    %c0_i32_0 = arith.constant 0 : i32
    return %c0_i32 : i32
  }
  func.func @transform_9(%arg0: i32) -> (i32, i32) {
    %c0_i32 = arith.constant 0 : i32
    %c0_i32_0 = arith.constant 0 : i32
    return %c0_i32, %arg0 : i32, i32
  }
}

</mosaic_0001>

<llo_original>
// kernel: tpu_custom_call.1
$region0: #{tpu_custom_call.1}
  #allocation0 [shape = 'u32[]', space=smem, size = 0x4, offset = 0x4, fixed_abs, tag = 'smem constant byte address 0x4 - core index']
  #allocation1 [shape = 'u32[144,128]{1,0:T(1,128)}', space=vmem, size = 0x12000, scoped, tag = 'internal scratch']
  #allocation2 [shape = 'f32[1]{0:T(128)S(6)}', space=smem, size = 0x200, scoped, tag = 'scoped memory for tpu_custom_call.1']
  %s0 = inlined_call_operand.hbm [shape: bf16[16,96], index: 0, kind: input, shape index: {}]
  %s1 = inlined_call_operand.hbm [shape: bf16[96,128], index: 1, kind: input, shape index: {}]
  %s2 = inlined_call_operand.vmem [shape: f32[1,128], index: 2, kind: input, shape index: {}]
  %s3 = inlined_call_operand.hbm [shape: bf16[32,32], index: 3, kind: input, shape index: {}]
  %s4 = inlined_call_operand.vmem [shape: f32[1,32], index: 4, kind: input, shape index: {}]
  %s5 = inlined_call_operand.vmem [shape: f32[1,32], index: 5, kind: input, shape index: {}]
  %s6 = inlined_call_operand.vmem [shape: f32[1,32], index: 6, kind: input, shape index: {}]
  %s7 = inlined_call_operand.vmem [shape: f32[1,32], index: 7, kind: input, shape index: {}]
  %s8 = inlined_call_operand.<no memory space> [shape: f32[1], index: 8, kind: input, shape index: {}]
  %s9 = inlined_call_operand.hbm [shape: f32[1,128], index: 9, kind: output, shape index: {}]
  %s10 = sld [smem:[#allocation0]]
  $region58: #{tpu_custom_call.1} parent=0
    _
  %s12 = ssub.s32 1, %s10
  %s13 = scalar_select 0, %s12, %s10
  %14 = sst [smem:[#allocation2]] %s8
  $region1: #{tpu_custom_call.1} parent=0
    #allocation3 [shape = 'u8[32768]{0}', space=vmem, size = 0x8000, scoped, tag = 'input window, operand 0, single buffered']
    #allocation4 [shape = 's32[1]{0}', space=sflag, size = 0x4, scoped, tag = 'scoped memory for tpu_custom_call.1']
    #allocation5 [shape = 's32[1]{0}', space=sflag, size = 0x4, scoped, tag = 'scoped memory for tpu_custom_call.1']
    #allocation6 [shape = 'u8[24576]{0}', space=vmem, size = 0x6000, scoped, tag = 'input window, operand 1, single buffered']
    #allocation7 [shape = 's32[1]{0}', space=sflag, size = 0x4, scoped, tag = 'scoped memory for tpu_custom_call.1']
    #allocation8 [shape = 'u8[8192]{0}', space=vmem, size = 0x2000, scoped, tag = 'input window, operand 3, single buffered']
    #allocation9 [shape = 'u8[512]{0}', space=vmem, size = 0x400, scoped, tag = 'output window, operand 0, single buffered']
    %15 = vsyncpa [#allocation4], 0
    %16 = vsyncpa [#allocation7], 0
    %17 = vsyncpa [#allocation5], 0
    // Predicated region
    $region2: #{tpu_custom_call.1} parent=1 // pred_check
      _
    $region3: #{tpu_custom_call.1} parent=1 // pred_check_branch
      %19 = sbr.rel (0) target = $region5
    $region4: #{tpu_custom_call.1} parent=1 // pred_region
      %s21 = ssub.s32 1024, 128
      %22 = vsyncadd [#allocation4], %s21
      %s23 = sshll.u32 [#allocation3], 4
      %s24 = int_to_ptr.vmem [resolvable:$true] %s23
      %29 = dma.hbm_to_vmem [thread:$0]  %s0, 128, %s24, [#allocation4], 64, 64, 4
    $region5: #{tpu_custom_call.1} parent=1 // pred_fallthru
      _
    // Predicated region
    $region6: #{tpu_custom_call.1} parent=1 // pred_check
      _
    $region7: #{tpu_custom_call.1} parent=1 // pred_check_branch
      %31 = sbr.rel (0) target = $region9
    $region8: #{tpu_custom_call.1} parent=1 // pred_region
      %s33 = ssub.s32 768, 768
      %34 = vsyncadd [#allocation7], %s33
      %s35 = sshll.u32 [#allocation6], 4
      %s36 = int_to_ptr.vmem [resolvable:$true] %s35
      %41 = dma.hbm_to_vmem [thread:$0]  %s1, 768, %s36, [#allocation7], 64, 64, 4
    $region9: #{tpu_custom_call.1} parent=1 // pred_fallthru
      _
    // Predicated region
    $region10: #{tpu_custom_call.1} parent=1 // pred_check
      _
    $region11: #{tpu_custom_call.1} parent=1 // pred_check_branch
      %43 = sbr.rel (0) target = $region13
    $region12: #{tpu_custom_call.1} parent=1 // pred_region
      _
    $region13: #{tpu_custom_call.1} parent=1 // pred_fallthru
      _
    // Predicated region
    $region14: #{tpu_custom_call.1} parent=1 // pred_check
      _
    $region15: #{tpu_custom_call.1} parent=1 // pred_check_branch
      %45 = sbr.rel (0) target = $region17
    $region16: #{tpu_custom_call.1} parent=1 // pred_region
      %s47 = ssub.s32 256, 256
      %48 = vsyncadd [#allocation7], %s47
      %s49 = sshll.u32 [#allocation8], 4
      %s50 = int_to_ptr.vmem [resolvable:$true] %s49
      %55 = dma.hbm_to_vmem [thread:$0]  %s3, 256, %s50, [#allocation7], 64, 64, 4
    $region17: #{tpu_custom_call.1} parent=1 // pred_fallthru
      _
    // Predicated region
    $region18: #{tpu_custom_call.1} parent=1 // pred_check
      _
    $region19: #{tpu_custom_call.1} parent=1 // pred_check_branch
      %57 = sbr.rel (0) target = $region21
    $region20: #{tpu_custom_call.1} parent=1 // pred_region
      _
    $region21: #{tpu_custom_call.1} parent=1 // pred_fallthru
      _
    // Predicated region
    $region22: #{tpu_custom_call.1} parent=1 // pred_check
      _
    $region23: #{tpu_custom_call.1} parent=1 // pred_check_branch
      %59 = sbr.rel (0) target = $region25
    $region24: #{tpu_custom_call.1} parent=1 // pred_region
      _
    $region25: #{tpu_custom_call.1} parent=1 // pred_fallthru
      _
    // Predicated region
    $region26: #{tpu_custom_call.1} parent=1 // pred_check
      _
    $region27: #{tpu_custom_call.1} parent=1 // pred_check_branch
      %61 = sbr.rel (0) target = $region29
    $region28: #{tpu_custom_call.1} parent=1 // pred_region
      _
    $region29: #{tpu_custom_call.1} parent=1 // pred_fallthru
      _
    // Predicated region
    $region30: #{tpu_custom_call.1} parent=1 // pred_check
      _
    $region31: #{tpu_custom_call.1} parent=1 // pred_check_branch
      %63 = sbr.rel (0) target = $region33
    $region32: #{tpu_custom_call.1} parent=1 // pred_region
      _
    $region33: #{tpu_custom_call.1} parent=1 // pred_fallthru
      _
    // Predicated region
    $region34: #{tpu_custom_call.1} parent=1 // pred_check
      _
    $region35: #{tpu_custom_call.1} parent=1 // pred_check_branch
      %65 = sbr.rel (0) target = $region37
    $region36: #{tpu_custom_call.1} parent=1 // pred_region
      _
    $region37: #{tpu_custom_call.1} parent=1 // pred_fallthru
      _
    // Predicated region
    $region38: #{tpu_custom_call.1} parent=1 // pred_check
      _
    $region39: #{tpu_custom_call.1} parent=1 // pred_check_branch
      %67 = sbr.rel (0) target = $region41
    $region40: #{tpu_custom_call.1} parent=1 // pred_region
      %68 = dma.done [#allocation4], 1024
    $region41: #{tpu_custom_call.1} parent=1 // pred_fallthru
      _
    // Predicated region
    $region42: #{tpu_custom_call.1} parent=1 // pred_check
      _
    $region43: #{tpu_custom_call.1} parent=1 // pred_check_branch
      %70 = sbr.rel (0) target = $region45
    $region44: #{tpu_custom_call.1} parent=1 // pred_region
      %71 = dma.done [#allocation7], 768
    $region45: #{tpu_custom_call.1} parent=1 // pred_fallthru
      _
    // Predicated region
    $region46: #{tpu_custom_call.1} parent=1 // pred_check
      _
    $region47: #{tpu_custom_call.1} parent=1 // pred_check_branch
      %73 = sbr.rel (0) target = $region49
    $region48: #{tpu_custom_call.1} parent=1 // pred_region
      %74 = dma.done [#allocation7], 256
    $region49: #{tpu_custom_call.1} parent=1 // pred_fallthru
      _
    %v76 = vld [vmem:[#allocation3] sm:$0xf]
    %v77 = vld [vmem:[#allocation3 + $0x4] sm:$0xf]
    %v78 = vld [vmem:[#allocation3 + $0x8] sm:$0xf]
    %v79 = vld [vmem:[#allocation3 + $0xc] sm:$0xf]
    %v80 = vld [vmem:[#allocation3 + $0x10] sm:$0xf]
    %v81 = vld [vmem:[#allocation3 + $0x14] sm:$0xf]
    %v82 = vld [vmem:[#allocation3 + $0x18] sm:$0xf]
    %v83 = vld [vmem:[#allocation3 + $0x1c] sm:$0xf]
    %v84 = vld [vmem:[#allocation3 + $0x20] sm:$0xf]
    %v85 = vld [vmem:[#allocation3 + $0x24] sm:$0xf]
    %v86 = vld [vmem:[#allocation3 + $0x28] sm:$0xf]
    %v87 = vld [vmem:[#allocation3 + $0x2c] sm:$0xf]
    %v88 = vld [vmem:[#allocation3 + $0x30] sm:$0xf]
    %v89 = vld [vmem:[#allocation3 + $0x34] sm:$0xf]
    %v90 = vld [vmem:[#allocation3 + $0x38] sm:$0xf]
    %v91 = vld [vmem:[#allocation3 + $0x3c] sm:$0xf]
    %v92 = vld [vmem:[#allocation6] sm:$0xf]
    %v93 = vld [vmem:[#allocation6 + $0x4] sm:$0xf]
    %v94 = vld [vmem:[#allocation6 + $0x8] sm:$0xf]
    %v95 = vld [vmem:[#allocation6 + $0xc] sm:$0xf]
    %v96 = vld [vmem:[#allocation6 + $0x10] sm:$0xf]
    %v97 = vld [vmem:[#allocation6 + $0x14] sm:$0xf]
    %v98 = vld [vmem:[#allocation6 + $0x18] sm:$0xf]
    %v99 = vld [vmem:[#allocation6 + $0x1c] sm:$0xf]
    %v100 = vld [vmem:[#allocation6 + $0x20] sm:$0xf]
    %v101 = vld [vmem:[#allocation6 + $0x24] sm:$0xf]
    %v102 = vld [vmem:[#allocation6 + $0x28] sm:$0xf]
    %v103 = vld [vmem:[#allocation6 + $0x2c] sm:$0xf]
    %v104 = vld [vmem:[%s2] sm:$0x1]
    %v106 = vlaneseq
    %v107 = vshrl.u32 %v106, 7
    %v108 = vsub.s32 0, %v107
    %v109 = vrot.slane %v104, %v108
    %v127 = vunpack.c.l.b16 %v76
    %v128 = vunpack.c.l.b16 %v77
    %v129 = vunpack.c.l.b16 %v78
    %v130 = vunpack.c.l.b16 %v79
    %v131 = vunpack.c.l.b16 %v80
    %v132 = vunpack.c.l.b16 %v81
    %v133 = vunpack.c.l.b16 %v82
    %v134 = vunpack.c.l.b16 %v83
    %v135 = vunpack.c.l.b16 %v84
    %v136 = vunpack.c.l.b16 %v85
    %v137 = vunpack.c.l.b16 %v86
    %v138 = vunpack.c.l.b16 %v87
    %v139 = vunpack.c.l.b16 %v88
    %v140 = vunpack.c.l.b16 %v89
    %v141 = vunpack.c.l.b16 %v90
    %v142 = vunpack.c.l.b16 %v91
    %v143 = vpack.c.b16 %v128, %v127
    %v144 = vpack.c.b16 %v130, %v129
    %v145 = vpack.c.b16 %v132, %v131
    %v146 = vpack.c.b16 %v134, %v133
    %v147 = vpack.c.b16 %v136, %v135
    %v148 = vpack.c.b16 %v138, %v137
    %v149 = vpack.c.b16 %v140, %v139
    %v150 = vpack.c.b16 %v142, %v141
    %v163 = vunpack.c.l.b16 %v92
    %v164 = vunpack.c.l.b16 %v93
    %v165 = vunpack.c.l.b16 %v94
    %v166 = vunpack.c.l.b16 %v95
    %v167 = vunpack.c.l.b16 %v96
    %v168 = vunpack.c.l.b16 %v97
    %v169 = vunpack.c.l.b16 %v98
    %v170 = vunpack.c.l.b16 %v99
    %v171 = vunpack.c.l.b16 %v100
    %v172 = vunpack.c.l.b16 %v101
    %v173 = vunpack.c.l.b16 %v102
    %v174 = vunpack.c.l.b16 %v103
    %v175 = vpack.c.b16 %v164, %v163
    %v176 = vpack.c.b16 %v166, %v165
    %v177 = vpack.c.b16 %v168, %v167
    %v178 = vpack.c.b16 %v170, %v169
    %v179 = vpack.c.b16 %v172, %v171
    %v180 = vpack.c.b16 %v174, %v173
    %vm187 = vcmask 785408
    %v189 = vsel %vm187, %v143, 0
    %v192 = vsel %vm187, %v144, 0
    %v195 = vsel %vm187, %v145, 0
    %v198 = vsel %vm187, %v146, 0
    %v201 = vsel %vm187, %v147, 0
    %v204 = vsel %vm187, %v148, 0
    %v207 = vsel %vm187, %v149, 0
    %v210 = vsel %vm187, %v150, 0
    %212 = vmatprep.subr.bf16.mxu0 0
    %213 = vmatpush1.bf16.msra.mxu0 %v175
    %214 = vmatprep.subr.bf16.mxu0 0
    %215 = vmatpush1.bf16.msra.mxu0 %v176
    %216 = vmatprep.subr.bf16.mxu0 0
    %217 = vmatpush1.bf16.msra.mxu0 %v177
    %218 = vmatprep.subr.bf16.mxu0 0
    %219 = vmatpush1.bf16.msra.mxu0 %v178
    %220 = vmatprep.subr.bf16.mxu0 0
    %221 = vmatpush1.bf16.msra.mxu0 %v179
    %222 = vmatprep.subr.bf16.mxu0 0
    %223 = vmatpush1.bf16.msra.mxu0 %v180
    %224 = vmatprep.subr.bf16.mxu0 0
    %225 = vmatpush1.bf16.msra.mxu0 0
    %226 = vmatprep.subr.bf16.mxu0 0
    %227 = vmatpush1.bf16.msra.mxu0 0
    %228 = vmatprep.subr.bf16.mxu0 0
    %229 = vmatpush1.bf16.msra.mxu0 0
    %230 = vmatprep.subr.bf16.mxu0 0
    %231 = vmatpush1.bf16.msra.mxu0 0
    %232 = vmatprep.subr.bf16.mxu0 0
    %233 = vmatpush1.bf16.msra.mxu0 0
    %234 = vmatprep.subr.bf16.mxu0 0
    %235 = vmatpush1.bf16.msra.mxu0 0
    %236 = vmatprep.subr.bf16.mxu0 0
    %237 = vmatpush1.bf16.msra.mxu0 0
    %238 = vmatprep.subr.bf16.mxu0 0
    %239 = vmatpush1.bf16.msra.mxu0 0
    %240 = vmatprep.subr.bf16.mxu0 0
    %241 = vmatpush1.bf16.msra.mxu0 0
    %242 = vmatprep.subr.bf16.mxu0 0
    %243 = vmatpush1.bf16.msra.mxu0 0
    %244 = vmatprep.mubr.bf16.mxu0 0
    %245 = vmatmul.mubr.bf16.gmra.mrb[0].mxu0 %v189
    %v246 = vpop.f32.mrb[0].mxu0
    %v247 = vadd.f32 %v109, %v246
    %v248 = vpop.f32.mrb[0].mxu0
    %v249 = vpop.f32.mrb[0].mxu0
    %v250 = vadd.f32 %v109, %v249
    %v251 = vpop.f32.mrb[0].mxu0
    %252 = vmatprep.mubr.bf16.mxu0 0
    %253 = vmatmul.mubr.bf16.gmra.mrb[0].mxu0 %v192
    %v254 = vpop.f32.mrb[0].mxu0
    %v255 = vadd.f32 %v109, %v254
    %v256 = vpop.f32.mrb[0].mxu0
    %v257 = vpop.f32.mrb[0].mxu0
    %v258 = vadd.f32 %v109, %v257
    %v259 = vpop.f32.mrb[0].mxu0
    %260 = vmatprep.mubr.bf16.mxu0 0
    %261 = vmatmul.mubr.bf16.gmra.mrb[0].mxu0 %v195
    %v262 = vpop.f32.mrb[0].mxu0
    %v263 = vadd.f32 %v109, %v262
    %v264 = vpop.f32.mrb[0].mxu0
    %v265 = vpop.f32.mrb[0].mxu0
    %v266 = vadd.f32 %v109, %v265
    %v267 = vpop.f32.mrb[0].mxu0
    %268 = vmatprep.mubr.bf16.mxu0 0
    %269 = vmatmul.mubr.bf16.gmra.mrb[0].mxu0 %v198
    %v270 = vpop.f32.mrb[0].mxu0
    %v271 = vadd.f32 %v109, %v270
    %v272 = vpop.f32.mrb[0].mxu0
    %v273 = vpop.f32.mrb[0].mxu0
    %v274 = vadd.f32 %v109, %v273
    %v275 = vpop.f32.mrb[0].mxu0
    %276 = vmatprep.mubr.bf16.mxu0 0
    %277 = vmatmul.mubr.bf16.gmra.mrb[0].mxu0 %v201
    %v278 = vpop.f32.mrb[0].mxu0
    %v279 = vadd.f32 %v109, %v278
    %v280 = vpop.f32.mrb[0].mxu0
    %v281 = vpop.f32.mrb[0].mxu0
    %v282 = vadd.f32 %v109, %v281
    %v283 = vpop.f32.mrb[0].mxu0
    %284 = vmatprep.mubr.bf16.mxu0 0
    %285 = vmatmul.mubr.bf16.gmra.mrb[0].mxu0 %v204
    %v286 = vpop.f32.mrb[0].mxu0
    %v287 = vadd.f32 %v109, %v286
    %v288 = vpop.f32.mrb[0].mxu0
    %v289 = vpop.f32.mrb[0].mxu0
    %v290 = vadd.f32 %v109, %v289
    %v291 = vpop.f32.mrb[0].mxu0
    %292 = vmatprep.mubr.bf16.mxu0 0
    %293 = vmatmul.mubr.bf16.gmra.mrb[0].mxu0 %v207
    %v294 = vpop.f32.mrb[0].mxu0
    %v295 = vadd.f32 %v109, %v294
    %v296 = vpop.f32.mrb[0].mxu0
    %v297 = vpop.f32.mrb[0].mxu0
    %v298 = vadd.f32 %v109, %v297
    %v299 = vpop.f32.mrb[0].mxu0
    %300 = vmatprep.mubr.bf16.mxu0 0
    %301 = vmatmul.mubr.bf16.gmra.mrb[0].mxu0 %v210
    %v302 = vpop.f32.mrb[0].mxu0
    %v303 = vadd.f32 %v109, %v302
    %v304 = vpop.f32.mrb[0].mxu0
    %v305 = vpop.f32.mrb[0].mxu0
    %v306 = vadd.f32 %v109, %v305
    %v307 = vpop.f32.mrb[0].mxu0
    %308 = vdwg.mxu0
    %v309 = vmax.f32 %v247, 0.0
    %v310 = vmax.f32 %v250, 0.0
    %v311 = vmax.f32 %v255, 0.0
    %v312 = vmax.f32 %v258, 0.0
    %v313 = vmax.f32 %v263, 0.0
    %v314 = vmax.f32 %v266, 0.0
    %v315 = vmax.f32 %v271, 0.0
    %v316 = vmax.f32 %v274, 0.0
    %v317 = vmax.f32 %v279, 0.0
    %v318 = vmax.f32 %v282, 0.0
    %v319 = vmax.f32 %v287, 0.0
    %v320 = vmax.f32 %v290, 0.0
    %v321 = vmax.f32 %v295, 0.0
    %v322 = vmax.f32 %v298, 0.0
    %v323 = vmax.f32 %v303, 0.0
    %v324 = vmax.f32 %v306, 0.0
    %341 = vrot.lane.b32.xlu0 %v309, 96
    %v342 = vpop.permute.xlu0 %341
    %343 = vrot.lane.b32.xlu0 %v310, 96
    %v344 = vpop.permute.xlu0 %343
    %345 = vrot.lane.b32.xlu0 %v311, 96
    %v346 = vpop.permute.xlu0 %345
    %347 = vrot.lane.b32.xlu0 %v312, 96
    %v348 = vpop.permute.xlu0 %347
    %349 = vrot.lane.b32.xlu0 %v313, 96
    %v350 = vpop.permute.xlu0 %349
    %351 = vrot.lane.b32.xlu0 %v314, 96
    %v352 = vpop.permute.xlu0 %351
    %353 = vrot.lane.b32.xlu0 %v315, 96
    %v354 = vpop.permute.xlu0 %353
    %355 = vrot.lane.b32.xlu0 %v316, 96
    %v356 = vpop.permute.xlu0 %355
    %357 = vrot.lane.b32.xlu0 %v317, 96
    %v358 = vpop.permute.xlu0 %357
    %359 = vrot.lane.b32.xlu0 %v318, 96
    %v360 = vpop.permute.xlu0 %359
    %361 = vrot.lane.b32.xlu0 %v319, 96
    %v362 = vpop.permute.xlu0 %361
    %363 = vrot.lane.b32.xlu0 %v320, 96
    %v364 = vpop.permute.xlu0 %363
    %365 = vrot.lane.b32.xlu0 %v321, 96
    %v366 = vpop.permute.xlu0 %365
    %367 = vrot.lane.b32.xlu0 %v322, 96
    %v368 = vpop.permute.xlu0 %367
    %369 = vrot.lane.b32.xlu0 %v323, 96
    %v370 = vpop.permute.xlu0 %369
    %371 = vrot.lane.b32.xlu0 %v324, 96
    %v372 = vpop.permute.xlu0 %371
    %v389 = vadd.f32 %v309, %v342
    %v390 = vadd.f32 %v310, %v344
    %v391 = vadd.f32 %v311, %v346
    %v392 = vadd.f32 %v312, %v348
    %v393 = vadd.f32 %v313, %v350
    %v394 = vadd.f32 %v314, %v352
    %v395 = vadd.f32 %v315, %v354
    %v396 = vadd.f32 %v316, %v356
    %v397 = vadd.f32 %v317, %v358
    %v398 = vadd.f32 %v318, %v360
    %v399 = vadd.f32 %v319, %v362
    %v400 = vadd.f32 %v320, %v364
    %v401 = vadd.f32 %v321, %v366
    %v402 = vadd.f32 %v322, %v368
    %v403 = vadd.f32 %v323, %v370
    %v404 = vadd.f32 %v324, %v372
    %405 = vrot.lane.b32.xlu0 %v309, 64
    %v406 = vpop.permute.xlu0 %405
    %407 = vrot.lane.b32.xlu0 %v310, 64
    %v408 = vpop.permute.xlu0 %407
    %409 = vrot.lane.b32.xlu0 %v311, 64
    %v410 = vpop.permute.xlu0 %409
    %411 = vrot.lane.b32.xlu0 %v312, 64
    %v412 = vpop.permute.xlu0 %411
    %413 = vrot.lane.b32.xlu0 %v313, 64
    %v414 = vpop.permute.xlu0 %413
    %415 = vrot.lane.b32.xlu0 %v314, 64
    %v416 = vpop.permute.xlu0 %415
    %417 = vrot.lane.b32.xlu0 %v315, 64
    %v418 = vpop.permute.xlu0 %417
    %419 = vrot.lane.b32.xlu0 %v316, 64
    %v420 = vpop.permute.xlu0 %419
    %421 = vrot.lane.b32.xlu0 %v317, 64
    %v422 = vpop.permute.xlu0 %421
    %423 = vrot.lane.b32.xlu0 %v318, 64
    %v424 = vpop.permute.xlu0 %423
    %425 = vrot.lane.b32.xlu0 %v319, 64
    %v426 = vpop.permute.xlu0 %425
    %427 = vrot.lane.b32.xlu0 %v320, 64
    %v428 = vpop.permute.xlu0 %427
    %429 = vrot.lane.b32.xlu0 %v321, 64
    %v430 = vpop.permute.xlu0 %429
    %431 = vrot.lane.b32.xlu0 %v322, 64
    %v432 = vpop.permute.xlu0 %431
    %433 = vrot.lane.b32.xlu0 %v323, 64
    %v434 = vpop.permute.xlu0 %433
    %435 = vrot.lane.b32.xlu0 %v324, 64
    %v436 = vpop.permute.xlu0 %435
    %v453 = vadd.f32 %v389, %v406
    %v454 = vadd.f32 %v390, %v408
    %v455 = vadd.f32 %v391, %v410
    %v456 = vadd.f32 %v392, %v412
    %v457 = vadd.f32 %v393, %v414
    %v458 = vadd.f32 %v394, %v416
    %v459 = vadd.f32 %v395, %v418
    %v460 = vadd.f32 %v396, %v420
    %v461 = vadd.f32 %v397, %v422
    %v462 = vadd.f32 %v398, %v424
    %v463 = vadd.f32 %v399, %v426
    %v464 = vadd.f32 %v400, %v428
    %v465 = vadd.f32 %v401, %v430
    %v466 = vadd.f32 %v402, %v432
    %v467 = vadd.f32 %v403, %v434
    %v468 = vadd.f32 %v404, %v436
    %469 = vrot.lane.b32.xlu0 %v309, 32
    %v470 = vpop.permute.xlu0 %469
    %471 = vrot.lane.b32.xlu0 %v310, 32
    %v472 = vpop.permute.xlu0 %471
    %473 = vrot.lane.b32.xlu0 %v311, 32
    %v474 = vpop.permute.xlu0 %473
    %475 = vrot.lane.b32.xlu0 %v312, 32
    %v476 = vpop.permute.xlu0 %475
    %477 = vrot.lane.b32.xlu0 %v313, 32
    %v478 = vpop.permute.xlu0 %477
    %479 = vrot.lane.b32.xlu0 %v314, 32
    %v480 = vpop.permute.xlu0 %479
    %481 = vrot.lane.b32.xlu0 %v315, 32
    %v482 = vpop.permute.xlu0 %481
    %483 = vrot.lane.b32.xlu0 %v316, 32
    %v484 = vpop.permute.xlu0 %483
    %485 = vrot.lane.b32.xlu0 %v317, 32
    %v486 = vpop.permute.xlu0 %485
    %487 = vrot.lane.b32.xlu0 %v318, 32
    %v488 = vpop.permute.xlu0 %487
    %489 = vrot.lane.b32.xlu0 %v319, 32
    %v490 = vpop.permute.xlu0 %489
    %491 = vrot.lane.b32.xlu0 %v320, 32
    %v492 = vpop.permute.xlu0 %491
    %493 = vrot.lane.b32.xlu0 %v321, 32
    %v494 = vpop.permute.xlu0 %493
    %495 = vrot.lane.b32.xlu0 %v322, 32
    %v496 = vpop.permute.xlu0 %495
    %497 = vrot.lane.b32.xlu0 %v323, 32
    %v498 = vpop.permute.xlu0 %497
    %499 = vrot.lane.b32.xlu0 %v324, 32
    %v500 = vpop.permute.xlu0 %499
    %v517 = vadd.f32 %v453, %v470
    %v518 = vadd.f32 %v454, %v472
    %v519 = vadd.f32 %v455, %v474
    %v520 = vadd.f32 %v456, %v476
    %v521 = vadd.f32 %v457, %v478
    %v522 = vadd.f32 %v458, %v480
    %v523 = vadd.f32 %v459, %v482
    %v524 = vadd.f32 %v460, %v484
    %v525 = vadd.f32 %v461, %v486
    %v526 = vadd.f32 %v462, %v488
    %v527 = vadd.f32 %v463, %v490
    %v528 = vadd.f32 %v464, %v492
    %v529 = vadd.f32 %v465, %v494
    %v530 = vadd.f32 %v466, %v496
    %v531 = vadd.f32 %v467, %v498
    %v532 = vadd.f32 %v468, %v500
    %v533 = vpack.c.bf16 %v518, %v517
    %v534 = vpack.c.bf16 %v520, %v519
    %v535 = vpack.c.bf16 %v522, %v521
    %v536 = vpack.c.bf16 %v524, %v523
    %v537 = vpack.c.bf16 %v526, %v525
    %v538 = vpack.c.bf16 %v528, %v527
    %v539 = vpack.c.bf16 %v530, %v529
    %v540 = vpack.c.bf16 %v532, %v531
    %v541 = vld [vmem:[#allocation8] sm:$0xf]
    %v542 = vld [vmem:[#allocation8 + $0x4] sm:$0xf]
    %v543 = vld [vmem:[#allocation8 + $0x8] sm:$0xf]
    %v544 = vld [vmem:[#allocation8 + $0xc] sm:$0xf]
    %v545 = vld [vmem:[%s4] sm:$0x1]
    %v547 = vlaneseq
    %v548 = vshrl.u32 %v547, 7
    %v549 = vsub.s32 0, %v548
    %v550 = vrot.slane %v545, %v549
    %v556 = vunpack.c.l.b16 %v541
    %v557 = vunpack.c.l.b16 %v542
    %v558 = vunpack.c.l.b16 %v543
    %v559 = vunpack.c.l.b16 %v544
    %v560 = vpack.c.b16 %v557, %v556
    %v561 = vpack.c.b16 %v559, %v558
    %vm564 = vcmask 261120
    %v566 = vsel %vm564, %v533, 0
    %v569 = vsel %vm564, %v534, 0
    %v572 = vsel %vm564, %v535, 0
    %v575 = vsel %vm564, %v536, 0
    %v578 = vsel %vm564, %v537, 0
    %v581 = vsel %vm564, %v538, 0
    %v584 = vsel %vm564, %v539, 0
    %v587 = vsel %vm564, %v540, 0
    %589 = vmatprep.subr.bf16.mxu0 0
    %590 = vmatpush1.bf16.msra.mxu0 %v560
    %591 = vmatprep.subr.bf16.mxu0 0
    %592 = vmatpush1.bf16.msra.mxu0 %v561
    %593 = vmatprep.subr.bf16.mxu0 0
    %594 = vmatpush1.bf16.msra.mxu0 0
    %595 = vmatprep.subr.bf16.mxu0 0
    %596 = vmatpush1.bf16.msra.mxu0 0
    %597 = vmatprep.subr.bf16.mxu0 0
    %598 = vmatpush1.bf16.msra.mxu0 0
    %599 = vmatprep.subr.bf16.mxu0 0
    %600 = vmatpush1.bf16.msra.mxu0 0
    %601 = vmatprep.subr.bf16.mxu0 0
    %602 = vmatpush1.bf16.msra.mxu0 0
    %603 = vmatprep.subr.bf16.mxu0 0
    %604 = vmatpush1.bf16.msra.mxu0 0
    %605 = vmatprep.subr.bf16.mxu0 0
    %606 = vmatpush1.bf16.msra.mxu0 0
    %607 = vmatprep.subr.bf16.mxu0 0
    %608 = vmatpush1.bf16.msra.mxu0 0
    %609 = vmatprep.subr.bf16.mxu0 0
    %610 = vmatpush1.bf16.msra.mxu0 0
    %611 = vmatprep.subr.bf16.mxu0 0
    %612 = vmatpush1.bf16.msra.mxu0 0
    %613 = vmatprep.subr.bf16.mxu0 0
    %614 = vmatpush1.bf16.msra.mxu0 0
    %615 = vmatprep.subr.bf16.mxu0 0
    %616 = vmatpush1.bf16.msra.mxu0 0
    %617 = vmatprep.subr.bf16.mxu0 0
    %618 = vmatpush1.bf16.msra.mxu0 0
    %619 = vmatprep.subr.bf16.mxu0 0
    %620 = vmatpush1.bf16.msra.mxu0 0
    %621 = vmatprep.mubr.bf16.mxu0 0
    %622 = vmatmul.mubr.bf16.gmra.mrb[0].mxu0 %v566
    %v623 = vpop.f32.mrb[0].mxu0
    %v624 = vadd.f32 %v550, %v623
    %v625 = vpop.f32.mrb[0].mxu0
    %v626 = vpop.f32.mrb[0].mxu0
    %v627 = vadd.f32 %v550, %v626
    %v628 = vpop.f32.mrb[0].mxu0
    %629 = vmatprep.mubr.bf16.mxu0 0
    %630 = vmatmul.mubr.bf16.gmra.mrb[0].mxu0 %v569
    %v631 = vpop.f32.mrb[0].mxu0
    %v632 = vadd.f32 %v550, %v631
    %v633 = vpop.f32.mrb[0].mxu0
    %v634 = vpop.f32.mrb[0].mxu0
    %v635 = vadd.f32 %v550, %v634
    %v636 = vpop.f32.mrb[0].mxu0
    %637 = vmatprep.mubr.bf16.mxu0 0
    %638 = vmatmul.mubr.bf16.gmra.mrb[0].mxu0 %v572
    %v639 = vpop.f32.mrb[0].mxu0
    %v640 = vadd.f32 %v550, %v639
    %v641 = vpop.f32.mrb[0].mxu0
    %v642 = vpop.f32.mrb[0].mxu0
    %v643 = vadd.f32 %v550, %v642
    %v644 = vpop.f32.mrb[0].mxu0
    %645 = vmatprep.mubr.bf16.mxu0 0
    %646 = vmatmul.mubr.bf16.gmra.mrb[0].mxu0 %v575
    %v647 = vpop.f32.mrb[0].mxu0
    %v648 = vadd.f32 %v550, %v647
    %v649 = vpop.f32.mrb[0].mxu0
    %v650 = vpop.f32.mrb[0].mxu0
    %v651 = vadd.f32 %v550, %v650
    %v652 = vpop.f32.mrb[0].mxu0
    %653 = vmatprep.mubr.bf16.mxu0 0
    %654 = vmatmul.mubr.bf16.gmra.mrb[0].mxu0 %v578
    %v655 = vpop.f32.mrb[0].mxu0
    %v656 = vadd.f32 %v550, %v655
    %v657 = vpop.f32.mrb[0].mxu0
    %v658 = vpop.f32.mrb[0].mxu0
    %v659 = vadd.f32 %v550, %v658
    %v660 = vpop.f32.mrb[0].mxu0
    %661 = vmatprep.mubr.bf16.mxu0 0
    %662 = vmatmul.mubr.bf16.gmra.mrb[0].mxu0 %v581
    %v663 = vpop.f32.mrb[0].mxu0
    %v664 = vadd.f32 %v550, %v663
    %v665 = vpop.f32.mrb[0].mxu0
    %v666 = vpop.f32.mrb[0].mxu0
    %v667 = vadd.f32 %v550, %v666
    %v668 = vpop.f32.mrb[0].mxu0
    %669 = vmatprep.mubr.bf16.mxu0 0
    %670 = vmatmul.mubr.bf16.gmra.mrb[0].mxu0 %v584
    %v671 = vpop.f32.mrb[0].mxu0
    %v672 = vadd.f32 %v550, %v671
    %v673 = vpop.f32.mrb[0].mxu0
    %v674 = vpop.f32.mrb[0].mxu0
    %v675 = vadd.f32 %v550, %v674
    %v676 = vpop.f32.mrb[0].mxu0
    %677 = vmatprep.mubr.bf16.mxu0 0
    %678 = vmatmul.mubr.bf16.gmra.mrb[0].mxu0 %v587
    %v679 = vpop.f32.mrb[0].mxu0
    %v680 = vadd.f32 %v550, %v679
    %v681 = vpop.f32.mrb[0].mxu0
    %v682 = vpop.f32.mrb[0].mxu0
    %v683 = vadd.f32 %v550, %v682
    %v684 = vpop.f32.mrb[0].mxu0
    %685 = vdwg.mxu0
    %v686 = vmax.f32 %v624, 0.0
    %v687 = vmax.f32 %v627, 0.0
    %v688 = vmax.f32 %v632, 0.0
    %v689 = vmax.f32 %v635, 0.0
    %v690 = vmax.f32 %v640, 0.0
    %v691 = vmax.f32 %v643, 0.0
    %v692 = vmax.f32 %v648, 0.0
    %v693 = vmax.f32 %v651, 0.0
    %v694 = vmax.f32 %v656, 0.0
    %v695 = vmax.f32 %v659, 0.0
    %v696 = vmax.f32 %v664, 0.0
    %v697 = vmax.f32 %v667, 0.0
    %v698 = vmax.f32 %v672, 0.0
    %v699 = vmax.f32 %v675, 0.0
    %v700 = vmax.f32 %v680, 0.0
    %v701 = vmax.f32 %v683, 0.0
    %v702 = vld [vmem:[%s5] sm:$0x1]
    %v704 = vlaneseq
    %v705 = vshrl.u32 %v704, 7
    %v706 = vsub.s32 0, %v705
    %v707 = vrot.slane %v702, %v706
    %v709 = vmul.f32 %v686, %v707
    %v710 = vmul.f32 %v687, %v707
    %v711 = vmul.f32 %v688, %v707
    %v712 = vmul.f32 %v689, %v707
    %v713 = vmul.f32 %v690, %v707
    %v714 = vmul.f32 %v691, %v707
    %v715 = vmul.f32 %v692, %v707
    %v716 = vmul.f32 %v693, %v707
    %v717 = vmul.f32 %v694, %v707
    %v718 = vmul.f32 %v695, %v707
    %v719 = vmul.f32 %v696, %v707
    %v720 = vmul.f32 %v697, %v707
    %v721 = vmul.f32 %v698, %v707
    %v722 = vmul.f32 %v699, %v707
    %v723 = vmul.f32 %v700, %v707
    %v724 = vmul.f32 %v701, %v707
    %v725 = vsel %vm564, %v709, 0.0
    %726 = vadd.xlane.f32.xlu0 %v725
    %v727 = vpop.xlane.xlu0 %726
    %v728 = vsel %vm564, %v710, 0.0
    %729 = vadd.xlane.f32.xlu0 %v728
    %v730 = vpop.xlane.xlu0 %729
    %v731 = vsel %vm564, %v711, 0.0
    %732 = vadd.xlane.f32.xlu0 %v731
    %v733 = vpop.xlane.xlu0 %732
    %v734 = vsel %vm564, %v712, 0.0
    %735 = vadd.xlane.f32.xlu0 %v734
    %v736 = vpop.xlane.xlu0 %735
    %v737 = vsel %vm564, %v713, 0.0
    %738 = vadd.xlane.f32.xlu0 %v737
    %v739 = vpop.xlane.xlu0 %738
    %v740 = vsel %vm564, %v714, 0.0
    %741 = vadd.xlane.f32.xlu0 %v740
    %v742 = vpop.xlane.xlu0 %741
    %v743 = vsel %vm564, %v715, 0.0
    %744 = vadd.xlane.f32.xlu0 %v743
    %v745 = vpop.xlane.xlu0 %744
    %v746 = vsel %vm564, %v716, 0.0
    %747 = vadd.xlane.f32.xlu0 %v746
    %v748 = vpop.xlane.xlu0 %747
    %v749 = vsel %vm564, %v717, 0.0
    %750 = vadd.xlane.f32.xlu0 %v749
    %v751 = vpop.xlane.xlu0 %750
    %v752 = vsel %vm564, %v718, 0.0
    %753 = vadd.xlane.f32.xlu0 %v752
    %v754 = vpop.xlane.xlu0 %753
    %v755 = vsel %vm564, %v719, 0.0
    %756 = vadd.xlane.f32.xlu0 %v755
    %v757 = vpop.xlane.xlu0 %756
    %v758 = vsel %vm564, %v720, 0.0
    %759 = vadd.xlane.f32.xlu0 %v758
    %v760 = vpop.xlane.xlu0 %759
    %v761 = vsel %vm564, %v721, 0.0
    %762 = vadd.xlane.f32.xlu0 %v761
    %v763 = vpop.xlane.xlu0 %762
    %v764 = vsel %vm564, %v722, 0.0
    %765 = vadd.xlane.f32.xlu0 %v764
    %v766 = vpop.xlane.xlu0 %765
    %v767 = vsel %vm564, %v723, 0.0
    %768 = vadd.xlane.f32.xlu0 %v767
    %v769 = vpop.xlane.xlu0 %768
    %v770 = vsel %vm564, %v724, 0.0
    %771 = vadd.xlane.f32.xlu0 %v770
    %v772 = vpop.xlane.xlu0 %771
    %s773 = sld [smem:[#allocation2]]
    %v774 = vstv %s773
    %v775 = vadd.f32 %v727, %v774
    %v776 = vadd.f32 %v730, %v774
    %v777 = vadd.f32 %v733, %v774
    %v778 = vadd.f32 %v736, %v774
    %v779 = vadd.f32 %v739, %v774
    %v780 = vadd.f32 %v742, %v774
    %v781 = vadd.f32 %v745, %v774
    %v782 = vadd.f32 %v748, %v774
    %v783 = vadd.f32 %v751, %v774
    %v784 = vadd.f32 %v754, %v774
    %v785 = vadd.f32 %v757, %v774
    %v786 = vadd.f32 %v760, %v774
    %v787 = vadd.f32 %v763, %v774
    %v788 = vadd.f32 %v766, %v774
    %v789 = vadd.f32 %v769, %v774
    %v790 = vadd.f32 %v772, %v774
    %v807 = vlaneseq
    %v808 = vand.u32 %v807, 127
    %v809 = vlaneseq
    %v810 = vshrl.u32 %v809, 7
    %v811 = vsub.s32 %v808, %v810
    %v812 = vrot.slane %v775, %v811
    %v813 = vadd.s32 %v808, 4294967288
    %v814 = vlaneseq
    %v815 = vshrl.u32 %v814, 7
    %v816 = vsub.s32 %v813, %v815
    %v817 = vrot.slane %v776, %v816
    %vm818 = vcmask 130112
    %v819 = vsel %vm818, %v817, %v812
    %v820 = vadd.s32 %v808, 4294967280
    %v821 = vlaneseq
    %v822 = vshrl.u32 %v821, 7
    %v823 = vsub.s32 %v820, %v822
    %v824 = vrot.slane %v777, %v823
    %vm825 = vcmask 195712
    %v826 = vsel %vm825, %v824, %v819
    %v827 = vadd.s32 %v808, 4294967272
    %v828 = vlaneseq
    %v829 = vshrl.u32 %v828, 7
    %v830 = vsub.s32 %v827, %v829
    %v831 = vrot.slane %v778, %v830
    %vm832 = vcmask 261312
    %v833 = vsel %vm832, %v831, %v826
    %v834 = vadd.s32 %v808, 4294967264
    %v835 = vlaneseq
    %v836 = vshrl.u32 %v835, 7
    %v837 = vsub.s32 %v834, %v836
    %v838 = vrot.slane %v779, %v837
    %vm839 = vcmask 326912
    %v840 = vsel %vm839, %v838, %v833
    %v841 = vadd.s32 %v808, 4294967256
    %v842 = vlaneseq
    %v843 = vshrl.u32 %v842, 7
    %v844 = vsub.s32 %v841, %v843
    %v845 = vrot.slane %v780, %v844
    %vm846 = vcmask 392512
    %v847 = vsel %vm846, %v845, %v840
    %v848 = vadd.s32 %v808, 4294967248
    %v849 = vlaneseq
    %v850 = vshrl.u32 %v849, 7
    %v851 = vsub.s32 %v848, %v850
    %v852 = vrot.slane %v781, %v851
    %vm853 = vcmask 458112
    %v854 = vsel %vm853, %v852, %v847
    %v855 = vadd.s32 %v808, 4294967240
    %v856 = vlaneseq
    %v857 = vshrl.u32 %v856, 7
    %v858 = vsub.s32 %v855, %v857
    %v859 = vrot.slane %v782, %v858
    %vm860 = vcmask 523712
    %v861 = vsel %vm860, %v859, %v854
    %v862 = vadd.s32 %v808, 4294967232
    %v863 = vlaneseq
    %v864 = vshrl.u32 %v863, 7
    %v865 = vsub.s32 %v862, %v864
    %v866 = vrot.slane %v783, %v865
    %vm867 = vcmask 589312
    %v868 = vsel %vm867, %v866, %v861
    %v869 = vadd.s32 %v808, 4294967224
    %v870 = vlaneseq
    %v871 = vshrl.u32 %v870, 7
    %v872 = vsub.s32 %v869, %v871
    %v873 = vrot.slane %v784, %v872
    %vm874 = vcmask 654912
    %v875 = vsel %vm874, %v873, %v868
    %v876 = vadd.s32 %v808, 4294967216
    %v877 = vlaneseq
    %v878 = vshrl.u32 %v877, 7
    %v879 = vsub.s32 %v876, %v878
    %v880 = vrot.slane %v785, %v879
    %vm881 = vcmask 720512
    %v882 = vsel %vm881, %v880, %v875
    %v883 = vadd.s32 %v808, 4294967208
    %v884 = vlaneseq
    %v885 = vshrl.u32 %v884, 7
    %v886 = vsub.s32 %v883, %v885
    %v887 = vrot.slane %v786, %v886
    %vm888 = vcmask 786112
    %v889 = vsel %vm888, %v887, %v882
    %v890 = vadd.s32 %v808, 4294967200
    %v891 = vlaneseq
    %v892 = vshrl.u32 %v891, 7
    %v893 = vsub.s32 %v890, %v892
    %v894 = vrot.slane %v787, %v893
    %vm895 = vcmask 851712
    %v896 = vsel %vm895, %v894, %v889
    %v897 = vadd.s32 %v808, 4294967192
    %v898 = vlaneseq
    %v899 = vshrl.u32 %v898, 7
    %v900 = vsub.s32 %v897, %v899
    %v901 = vrot.slane %v788, %v900
    %vm902 = vcmask 917312
    %v903 = vsel %vm902, %v901, %v896
    %v904 = vadd.s32 %v808, 4294967184
    %v905 = vlaneseq
    %v906 = vshrl.u32 %v905, 7
    %v907 = vsub.s32 %v904, %v906
    %v908 = vrot.slane %v789, %v907
    %vm909 = vcmask 982912
    %v910 = vsel %vm909, %v908, %v903
    %v911 = vadd.s32 %v808, 4294967176
    %v912 = vlaneseq
    %v913 = vshrl.u32 %v912, 7
    %v914 = vsub.s32 %v911, %v913
    %v915 = vrot.slane %v790, %v914
    %vm916 = vcmask 1048512
    %v917 = vsel %vm916, %v915, %v910
    %919 = vst [vmem:[#allocation9] sm:$0x1] %v917
    // Predicated region
    $region50: #{tpu_custom_call.1} parent=1 // pred_check
      _
    $region51: #{tpu_custom_call.1} parent=1 // pred_check_branch
      %921 = sbr.rel (0) target = $region53
    $region52: #{tpu_custom_call.1} parent=1 // pred_region
      %s923 = ssub.s32 16, 16
      %924 = vsyncadd [#allocation5], %s923
      %s926 = sshll.u32 [#allocation9], 4
      %s927 = int_to_ptr.vmem [resolvable:$true] %s926
      %929 = dma.vmem_to_hbm [thread:$0]  %s927, 16, %s9, [#allocation5]
    $region53: #{tpu_custom_call.1} parent=1 // pred_fallthru
      _
    // Predicated region
    $region54: #{tpu_custom_call.1} parent=1 // pred_check
      _
    $region55: #{tpu_custom_call.1} parent=1 // pred_check_branch
      %931 = sbr.rel (0) target = $region57
    $region56: #{tpu_custom_call.1} parent=1 // pred_region
      %932 = dma.done [#allocation5], 16
    $region57: #{tpu_custom_call.1} parent=1 // pred_fallthru
      _
    %933 = vsyncpa [#allocation4], 1
    %934 = vsyncpa [#allocation7], 1
    %935 = vsyncpa [#allocation5], 1

</llo_original>
